<compile_context>
chip_gen: v5e
topology: v5e:2x2
jax: 0.10.0
libtpu: 0.0.40
codegen_flags: <defaults>
</compile_context>

<pallas_src>
import functools
import math

import jax
import jax.numpy as jnp
from jax.experimental import pallas as pl
from jax.experimental.pallas import tpu as pltpu


def _cdiv(a: int, b: int) -> int:
    return (a + b - 1) // b


def _round_up(n: int, m: int) -> int:
    return _cdiv(n, m) * m


def _vmem_capacity_bytes() -> int:
    try:
        return int(pltpu.get_tpu_info().vmem_capacity_bytes)
    except Exception:
        return 64 * 2 ** 20  # conservative fallback = v7x per-TC VMEM


def _pick_batch_tile(n: int, per_row_bytes: int, avail_bytes: int,
                     *, max_tile: int = 2048) -> tuple[int, int]:
    """Largest batch tile (multiple of 16, <= max_tile) fitting the VMEM budget."""
    cap = (max(0, avail_bytes) // max(per_row_bytes, 1)) // 16 * 16
    cap = max(16, min(max_tile, cap))
    if n <= cap:
        return n, 1          # single full-extent block — layout-legal for any n
    return cap, _cdiv(n, cap)


# --------------------- Path A: weights fully VMEM-resident ---------------------
def _simclr2_kernel_resident(x_ref, y_ref, w_x_ref, w_y_ref, b_enc_ref,
                             w_det_ref, b_det_ref, o_ref):
    # Stand-in encoder (placeholder for `self.model(x, y)`): concat-free dual matmul
    # x @ W_x + y @ W_y + b, bf16 operands with f32 MXU accumulation, then ReLU.
    feat = (jnp.dot(x_ref[...], w_x_ref[...], preferred_element_type=jnp.float32)
            + jnp.dot(y_ref[...], w_y_ref[...], preferred_element_type=jnp.float32)
            + b_enc_ref[...])
    feat = jnp.maximum(feat, 0.0)

    # Detection head: Linear(inp, 1) + Sigmoid.  Width-1 dot done on the VPU
    # (broadcast mul) + XLU (lane reduce) — the MXU stays free for the encoder.
    # TODO(synk): move to an MXU dot against an (inp,128)-padded w_det only if a
    #             bundle dump ever shows the lane reduce saturating XLU/VPU.
    logits = jnp.sum(feat * w_det_ref[...], axis=-1)                 # (bt,)
    scores = jax.nn.sigmoid(logits[None, :] + b_det_ref[0, 0])       # (1, bt)
    o_ref[...] = scores[None].astype(o_ref.dtype)                    # (1, 1, bt) lane-dense


# ------------- Path B: wide encoder, inp (K of detection dot) tiled ------------
def _simclr2_kernel_ktiled(x_ref, y_ref, w_x_ref, w_y_ref, b_enc_ref,
                           w_det_ref, b_det_ref, o_ref, acc_ref):
    k = pl.program_id(1)

    @pl.when(k == 0)
    def _():
        acc_ref[...] = jnp.zeros_like(acc_ref)

    feat = (jnp.dot(x_ref[...], w_x_ref[...], preferred_element_type=jnp.float32)
            + jnp.dot(y_ref[...], w_y_ref[...], preferred_element_type=jnp.float32)
            + b_enc_ref[...])
    feat = jnp.maximum(feat, 0.0)            # ReLU is elementwise over inp -> chunkable
    acc_ref[...] += jnp.sum(feat * w_det_ref[...], axis=-1)[None, :]

    @pl.when(k == pl.num_programs(1) - 1)
    def _():
        o_ref[...] = jax.nn.sigmoid(acc_ref[...] + b_det_ref[0, 0])[None].astype(o_ref.dtype)


@functools.partial(jax.jit, static_argnames=("force_k_tiled", "inp_tile"))
def simclr_stage2_forward(x, y, params, *, force_k_tiled=False, inp_tile=None):
    """SimCLRStage2.forward: x:[N,Dx], y:[N,Dy] -> [N,1] detection scores in (0,1)."""
    w_enc, b_enc, w_det, b_det = params
    N, dx = x.shape
    n_y, dy = y.shape
    assert n_y == N, "x and y must share the batch dimension"
    d_in, inp = w_enc.shape
    assert d_in == dx + dy

    f32, bf16 = jnp.float32, jnp.bfloat16
    vmem_cap = _vmem_capacity_bytes()
    budget = int(0.70 * vmem_cap)      # headroom for compiler scratch (esp. v7x 64 MiB)

    # bf16 streaming of the large operands; small biases / head weight stay f32.
    xb = x.astype(bf16)
    yb = y.astype(bf16)
    w_x = w_enc[:dx].astype(bf16)      # concat-free split of the encoder weight
    w_y = w_enc[dx:].astype(bf16)
    b_e = b_enc.reshape(1, inp).astype(f32)
    w_d = w_det.reshape(1, inp).astype(f32)
    b_d = b_det.reshape(1, 1).astype(f32)

    resident_w_bytes = (dx + dy) * inp * 2 + 2 * inp * 4
    use_resident = (not force_k_tiled) and resident_w_bytes <= budget // 4

    if use_resident:
        # ------------- Path A: resident weights, 1-D batch grid -------------
        per_row = 2 * (dx + dy) * 2 + inp * 4 + 2 * 4     # 2-buf bf16 x/y + feat + out
        avail = budget - resident_w_bytes - (2 << 20)
        batch_tile, num_tiles = _pick_batch_tile(N, per_row, avail)
        if num_tiles == 1 and N >= 128:
            # >=2 grid steps so ("parallel",) can feed both v7x TCs (free on v5e/v6e).
            batch_tile = _round_up(_cdiv(N, 2), 16)
            num_tiles = _cdiv(N, batch_tile)

        est = (resident_w_bytes
               + 2 * batch_tile * (dx + dy) * 2            # double-buffered x/y tiles
               + batch_tile * inp * 4                      # in-kernel feat temporary
               + 2 * batch_tile * 4                        # double-buffered output tile
               + (2 << 20))                                # internal scratch slack
        vmem_limit = int(min(max(2 * est, 16 << 20), int(0.75 * vmem_cap)))

        resident = pl.BlockSpec(memory_space=pltpu.MemorySpace.VMEM)
        out = pl.pallas_call(
            _simclr2_kernel_resident,
            out_shape=jax.ShapeDtypeStruct((num_tiles, 1, batch_tile), f32),
            grid_spec=pltpu.PrefetchScalarGridSpec(
                num_scalar_prefetch=0,
                grid=(num_tiles,),
                in_specs=[
                    # TODO(synk): bump to pipeline_mode=pl.Buffered(3) on v5e if a
                    #             trace shows exposed DMA at tile boundaries.
                    pl.BlockSpec((batch_tile, dx), lambda i: (i, 0)),   # x tile (ragged ok)
                    pl.BlockSpec((batch_tile, dy), lambda i: (i, 0)),   # y tile
                    resident,                                           # W_x
                    resident,                                           # W_y
                    resident,                                           # b_enc
                    resident,                                           # w_det row vector
                    pl.BlockSpec(memory_space=pltpu.MemorySpace.SMEM),  # b_det scalar
                ],
                out_specs=pl.BlockSpec((1, 1, batch_tile), lambda i: (i, 0, 0)),
            ),
            compiler_params=pltpu.CompilerParams(
                dimension_semantics=("parallel",),
                vmem_limit_bytes=vmem_limit),
        )(xb, yb, w_x, w_y, b_e, w_d, b_d)
    else:
        # ------- Path B: tile inp with an "arbitrary" axis + f32 accumulator -------
        if inp_tile is None:
            inp_tile = 512
        inp_tile = max(128, _round_up(min(inp_tile, inp), 128))
        inp_p = _round_up(inp, inp_tile)
        num_k = inp_p // inp_tile
        # Zero-pad only the (small) weights along inp; activations stay un-padded.
        w_x = jnp.zeros((dx, inp_p), bf16).at[:, :inp].set(w_x)
        w_y = jnp.zeros((dy, inp_p), bf16).at[:, :inp].set(w_y)
        b_e = jnp.zeros((1, inp_p), f32).at[:, :inp].set(b_e)
        w_d = jnp.zeros((1, inp_p), f32).at[:, :inp].set(w_d)

        fixed = 2 * (dx + dy) * inp_tile * 2 + 4 * inp_tile * 4 + (2 << 20)
        per_row = 2 * (dx + dy) * 2 + inp_tile * 4 + 4 + 2 * 4
        batch_tile, num_tiles = _pick_batch_tile(N, per_row, budget - fixed)
        if num_tiles == 1 and N >= 128:
            batch_tile = _round_up(_cdiv(N, 2), 16)
            num_tiles = _cdiv(N, batch_tile)

        est = (fixed + 2 * batch_tile * (dx + dy) * 2 + batch_tile * inp_tile * 4
               + batch_tile * 4 + 2 * batch_tile * 4)
        vmem_limit = int(min(max(2 * est, 16 << 20), int(0.75 * vmem_cap)))

        out = pl.pallas_call(
            _simclr2_kernel_ktiled,
            out_shape=jax.ShapeDtypeStruct((num_tiles, 1, batch_tile), f32),
            grid_spec=pltpu.PrefetchScalarGridSpec(
                num_scalar_prefetch=0,
                grid=(num_tiles, num_k),
                in_specs=[
                    # x/y block index is k-invariant => no re-DMA across the k axis.
                    pl.BlockSpec((batch_tile, dx), lambda i, k: (i, 0)),
                    pl.BlockSpec((batch_tile, dy), lambda i, k: (i, 0)),
                    pl.BlockSpec((dx, inp_tile), lambda i, k: (0, k)),  # W_x chunk
                    pl.BlockSpec((dy, inp_tile), lambda i, k: (0, k)),  # W_y chunk
                    pl.BlockSpec((1, inp_tile), lambda i, k: (0, k)),   # b_enc chunk
                    pl.BlockSpec((1, inp_tile), lambda i, k: (0, k)),   # w_det chunk
                    pl.BlockSpec(memory_space=pltpu.MemorySpace.SMEM),  # b_det scalar
                ],
                out_specs=pl.BlockSpec((1, 1, batch_tile), lambda i, k: (i, 0, 0)),
                scratch_shapes=[pltpu.VMEM((1, batch_tile), f32)],      # logit accumulator
            ),
            compiler_params=pltpu.CompilerParams(
                dimension_semantics=("parallel", "arbitrary"),
                vmem_limit_bytes=vmem_limit),
        )(xb, yb, w_x, w_y, b_e, w_d, b_d)

    return out.reshape(num_tiles * batch_tile, 1)[:N]


def init_params(key, d_in, inp):
    """Deterministic init mimicking PyTorch Linear defaults (uniform +/- 1/sqrt(fan_in))."""
    k1, k2, k3, k4 = jax.random.split(key, 4)
    bnd_enc = 1.0 / math.sqrt(d_in)
    bnd_det = 1.0 / math.sqrt(inp)
    w_enc = jax.random.uniform(k1, (d_in, inp), jnp.float32, -bnd_enc, bnd_enc)
    b_enc = jax.random.uniform(k2, (inp,), jnp.float32, -bnd_enc, bnd_enc)
    w_det = jax.random.uniform(k3, (inp, 1), jnp.float32, -bnd_det, bnd_det)
    b_det = jax.random.uniform(k4, (1,), jnp.float32, -bnd_det, bnd_det)
    return w_enc, b_enc, w_det, b_det


def _ref_forward(x, y, params):
    """Pure-JAX reference with the same bf16 rounding of the streamed operands."""
    w_enc, b_enc, w_det, b_det = params
    f32, bf16 = jnp.float32, jnp.bfloat16
    xy = jnp.concatenate([x.astype(bf16).astype(f32),
                          y.astype(bf16).astype(f32)], axis=-1)
    feat = jnp.maximum(xy @ w_enc.astype(bf16).astype(f32)
                       + b_enc.reshape(1, -1).astype(f32), 0.0)
    return jax.nn.sigmoid(feat @ w_det.astype(f32) + b_det.reshape(1, 1).astype(f32))


if __name__ == "__main__":
    key = jax.random.PRNGKey(0)
    kx, ky, kp, kq = jax.random.split(key, 4)

    # Case 1: tiny shapes, resident-weight path.
    batch, dx, dy, inp = 8, 16, 16, 32
    x = jax.random.normal(kx, (batch, dx), jnp.float32)
    y = jax.random.normal(ky, (batch, dy), jnp.float32)
    params = init_params(kp, dx + dy, inp)
    out = jax.block_until_ready(simclr_stage2_forward(x, y, params))
    assert out.shape == (batch, 1)
    assert jnp.allclose(out, _ref_forward(x, y, params), atol=1e-4, rtol=1e-4)

    # Case 2: force the inp-tiled (wide-encoder) fallback path with a ragged batch.
    batch2, dx2, dy2, inp2 = 20, 16, 16, 256
    x2 = jax.random.normal(kx, (batch2, dx2), jnp.float32)
    y2 = jax.random.normal(ky, (batch2, dy2), jnp.float32)
    params2 = init_params(kq, dx2 + dy2, inp2)
    out2 = jax.block_until_ready(
        simclr_stage2_forward(x2, y2, params2, force_k_tiled=True, inp_tile=128))
    assert out2.shape == (batch2, 1)
    assert jnp.allclose(out2, _ref_forward(x2, y2, params2), atol=1e-4, rtol=1e-4)

    print("KERNEL_OK")
</pallas_src>

<mosaic_0001>
module attributes {stable_mosaic.version = 11 : i64} {
  func.func @_simclr2_kernel_resident(%arg0: i32, %arg1: memref<8x16xbf16, #tpu.memory_space<vmem>>, %arg2: memref<8x16xbf16, #tpu.memory_space<vmem>>, %arg3: memref<16x32xbf16, #tpu.memory_space<vmem>>, %arg4: memref<16x32xbf16, #tpu.memory_space<vmem>>, %arg5: memref<1x32xf32, #tpu.memory_space<vmem>>, %arg6: memref<1x32xf32, #tpu.memory_space<vmem>>, %arg7: memref<1x1xf32, #tpu.memory_space<smem>>, %arg8: memref<1x1x8xf32, #tpu.memory_space<vmem>>) attributes {dimension_semantics = [#tpu.dimension_semantics<parallel>], iteration_bounds = array<i64: 1>, scalar_prefetch = 0 : i64, scratch_operands = 0 : i64, tpu.core_type = #tpu.core_type<tc>, window_params = [{transform_indices = @transform_0, window_bounds = array<i64: 8, 16>}, {transform_indices = @transform_1, window_bounds = array<i64: 8, 16>}, {pipeline_mode = #tpu.pipeline_mode<synchronous>, transform_indices = @transform_2, window_bounds = array<i64: 16, 32>}, {pipeline_mode = #tpu.pipeline_mode<synchronous>, transform_indices = @transform_3, window_bounds = array<i64: 16, 32>}, {pipeline_mode = #tpu.pipeline_mode<synchronous>, transform_indices = @transform_4, window_bounds = array<i64: 1, 32>}, {pipeline_mode = #tpu.pipeline_mode<synchronous>, transform_indices = @transform_5, window_bounds = array<i64: 1, 32>}, {transform_indices = @transform_6, window_bounds = array<i64: 1, 1>}, {transform_indices = @transform_7, window_bounds = array<i64: 1, 1, 8>}]} {
    %c0 = arith.constant 0 : index
    %c0_0 = arith.constant 0 : index
    %0 = vector.load %arg1[%c0, %c0_0] : memref<8x16xbf16, #tpu.memory_space<vmem>>, vector<8x16xbf16>
    %c0_1 = arith.constant 0 : index
    %c0_2 = arith.constant 0 : index
    %1 = vector.load %arg3[%c0_1, %c0_2] : memref<16x32xbf16, #tpu.memory_space<vmem>>, vector<16x32xbf16>
    %cst = arith.constant dense<0.000000e+00> : vector<8x32xf32>
    %2 = tpu.matmul %0, %1, %cst {dimension_numbers = #tpu.dot_dimension_numbers<[1], [0], [0], [1], [0, 0, 1, 1], [], []>} : vector<8x16xbf16>, vector<16x32xbf16>, vector<8x32xf32> -> vector<8x32xf32>
    %c0_3 = arith.constant 0 : index
    %c0_4 = arith.constant 0 : index
    %3 = vector.load %arg2[%c0_3, %c0_4] : memref<8x16xbf16, #tpu.memory_space<vmem>>, vector<8x16xbf16>
    %c0_5 = arith.constant 0 : index
    %c0_6 = arith.constant 0 : index
    %4 = vector.load %arg4[%c0_5, %c0_6] : memref<16x32xbf16, #tpu.memory_space<vmem>>, vector<16x32xbf16>
    %cst_7 = arith.constant dense<0.000000e+00> : vector<8x32xf32>
    %5 = tpu.matmul %3, %4, %cst_7 {dimension_numbers = #tpu.dot_dimension_numbers<[1], [0], [0], [1], [0, 0, 1, 1], [], []>} : vector<8x16xbf16>, vector<16x32xbf16>, vector<8x32xf32> -> vector<8x32xf32>
    %6 = arith.addf %2, %5 : vector<8x32xf32>
    %c0_8 = arith.constant 0 : index
    %c0_9 = arith.constant 0 : index
    %7 = vector.load %arg5[%c0_8, %c0_9] : memref<1x32xf32, #tpu.memory_space<vmem>>, vector<1x32xf32>
    %8 = vector.broadcast %7 : vector<1x32xf32> to vector<8x32xf32>
    %9 = arith.addf %6, %8 : vector<8x32xf32>
    %cst_10 = arith.constant 0.000000e+00 : f32
    %10 = vector.broadcast %cst_10 : f32 to vector<8x32xf32>
    %11 = arith.maximumf %9, %10 : vector<8x32xf32>
    %c0_11 = arith.constant 0 : index
    %c0_12 = arith.constant 0 : index
    %12 = vector.load %arg6[%c0_11, %c0_12] : memref<1x32xf32, #tpu.memory_space<vmem>>, vector<1x32xf32>
    %13 = vector.broadcast %12 : vector<1x32xf32> to vector<8x32xf32>
    %14 = arith.mulf %11, %13 : vector<8x32xf32>
    %cst_13 = arith.constant dense<0.000000e+00> : vector<8xf32>
    %15 = vector.multi_reduction <add>, %14, %cst_13 [1] : vector<8x32xf32> to vector<8xf32>
    %16 = vector.shape_cast %15 : vector<8xf32> to vector<1x8xf32>
    %c0_14 = arith.constant 0 : index
    %c0_15 = arith.constant 0 : index
    %17 = memref.load %arg7[%c0_14, %c0_15] : memref<1x1xf32, #tpu.memory_space<smem>>
    %18 = vector.broadcast %17 : f32 to vector<1x8xf32>
    %19 = arith.addf %16, %18 : vector<1x8xf32>
    %20 = arith.negf %19 : vector<1x8xf32>
    %21 = math.exp %20 : vector<1x8xf32>
    %cst_16 = arith.constant 1.000000e+00 : f32
    %22 = vector.broadcast %cst_16 : f32 to vector<1x8xf32>
    %23 = arith.addf %22, %21 : vector<1x8xf32>
    %24 = arith.divf %22, %23 : vector<1x8xf32>
    %25 = vector.shape_cast %24 : vector<1x8xf32> to vector<1x1x8xf32>
    %c0_17 = arith.constant 0 : index
    %c0_18 = arith.constant 0 : index
    %c0_19 = arith.constant 0 : index
    %26 = vector.load %arg8[%c0_17, %c0_18, %c0_19] : memref<1x1x8xf32, #tpu.memory_space<vmem>>, vector<1x1x8xf32>
    tpu.vector_store %arg8[%c0_17, %c0_18, %c0_19], %25 {strides = array<i32>} : memref<1x1x8xf32, #tpu.memory_space<vmem>>, vector<1x1x8xf32>,
    return
  }
  func.func @transform_0(%arg0: i32) -> (i32, i32) {
    %c0_i32 = arith.constant 0 : i32
    %c0_i32_0 = arith.constant 0 : i32
    return %arg0, %c0_i32 : i32, i32
  }
  func.func @transform_1(%arg0: i32) -> (i32, i32) {
    %c0_i32 = arith.constant 0 : i32
    %c0_i32_0 = arith.constant 0 : i32
    return %arg0, %c0_i32 : i32, i32
  }
  func.func @transform_2(%arg0: i32) -> (i32, i32) {
    %c0_i32 = arith.constant 0 : i32
    %c0_i32_0 = arith.constant 0 : i32
    %c0_i32_1 = arith.constant 0 : i32
    return %c0_i32, %c0_i32_0 : i32, i32
  }
  func.func @transform_3(%arg0: i32) -> (i32, i32) {
    %c0_i32 = arith.constant 0 : i32
    %c0_i32_0 = arith.constant 0 : i32
    %c0_i32_1 = arith.constant 0 : i32
    return %c0_i32, %c0_i32_0 : i32, i32
  }
  func.func @transform_4(%arg0: i32) -> (i32, i32) {
    %c0_i32 = arith.constant 0 : i32
    %c0_i32_0 = arith.constant 0 : i32
    %c0_i32_1 = arith.constant 0 : i32
    return %c0_i32, %c0_i32_0 : i32, i32
  }
  func.func @transform_5(%arg0: i32) -> (i32, i32) {
    %c0_i32 = arith.constant 0 : i32
    %c0_i32_0 = arith.constant 0 : i32
    %c0_i32_1 = arith.constant 0 : i32
    return %c0_i32, %c0_i32_0 : i32, i32
  }
  func.func @transform_6(%arg0: i32) -> (i32, i32) {
    %c0_i32 = arith.constant 0 : i32
    %c0_i32_0 = arith.constant 0 : i32
    %c0_i32_1 = arith.constant 0 : i32
    return %c0_i32, %c0_i32_0 : i32, i32
  }
  func.func @transform_7(%arg0: i32) -> (i32, i32, i32) {
    %c0_i32 = arith.constant 0 : i32
    %c0_i32_0 = arith.constant 0 : i32
    %c0_i32_1 = arith.constant 0 : i32
    return %arg0, %c0_i32, %c0_i32_0 : i32, i32, i32
  }
}

</mosaic_0001>

<llo_original>
// kernel: simclr_stage2_forward.1
$region0: #{simclr_stage2_forward.1}
  #allocation0 [shape = 'u32[]', space=smem, size = 0x4, offset = 0x4, fixed_abs, tag = 'smem constant byte address 0x4 - core index']
  #allocation1 [shape = 'u32[72,128]{1,0:T(1,128)}', space=vmem, size = 0x9000, scoped, tag = 'internal scratch']
  #allocation2 [shape = 'f32[1,1]{1,0:T(1,128)S(6)}', space=smem, size = 0x200, scoped, tag = 'scoped memory for simclr_stage2_forward.1']
  %s0 = inlined_call_operand.vmem [shape: bf16[8,16], index: 0, kind: input, shape index: {}]
  %s1 = inlined_call_operand.vmem [shape: bf16[8,16], index: 1, kind: input, shape index: {}]
  %s2 = inlined_call_operand.vmem [shape: bf16[16,32], index: 2, kind: input, shape index: {}]
  %s3 = inlined_call_operand.vmem [shape: bf16[16,32], index: 3, kind: input, shape index: {}]
  %s4 = inlined_call_operand.vmem [shape: f32[1,32], index: 4, kind: input, shape index: {}]
  %s5 = inlined_call_operand.vmem [shape: f32[1,32], index: 5, kind: input, shape index: {}]
  %s6 = inlined_call_operand.<no memory space> [shape: f32[1,1], index: 6, kind: input, shape index: {}]
  %s7 = inlined_call_operand.hbm [shape: f32[1,1,8], index: 7, kind: output, shape index: {}]
  %s8 = sld [smem:[#allocation0]]
  $region38: #{simclr_stage2_forward.1} parent=0
    _
  %s10 = ssub.s32 1, %s8
  %s11 = scalar_select 0, %s10, %s8
  %12 = sst [smem:[#allocation2]] %s6
  $region1: #{simclr_stage2_forward.1} parent=0
    #allocation3 [shape = 'u8[512]{0}', space=vmem, size = 0x400, scoped, tag = 'output window, operand 0, single buffered']
    #allocation4 [shape = 's32[1]{0}', space=sflag, size = 0x4, scoped, tag = 'scoped memory for simclr_stage2_forward.1']
    %13 = vsyncpa [#allocation4], 0
    // Predicated region
    $region2: #{simclr_stage2_forward.1} parent=1 // pred_check
      _
    $region3: #{simclr_stage2_forward.1} parent=1 // pred_check_branch
      %15 = sbr.rel (0) target = $region5
    $region4: #{simclr_stage2_forward.1} parent=1 // pred_region
      _
    $region5: #{simclr_stage2_forward.1} parent=1 // pred_fallthru
      _
    // Predicated region
    $region6: #{simclr_stage2_forward.1} parent=1 // pred_check
      _
    $region7: #{simclr_stage2_forward.1} parent=1 // pred_check_branch
      %17 = sbr.rel (0) target = $region9
    $region8: #{simclr_stage2_forward.1} parent=1 // pred_region
      _
    $region9: #{simclr_stage2_forward.1} parent=1 // pred_fallthru
      _
    // Predicated region
    $region10: #{simclr_stage2_forward.1} parent=1 // pred_check
      _
    $region11: #{simclr_stage2_forward.1} parent=1 // pred_check_branch
      %19 = sbr.rel (0) target = $region13
    $region12: #{simclr_stage2_forward.1} parent=1 // pred_region
      _
    $region13: #{simclr_stage2_forward.1} parent=1 // pred_fallthru
      _
    // Predicated region
    $region14: #{simclr_stage2_forward.1} parent=1 // pred_check
      _
    $region15: #{simclr_stage2_forward.1} parent=1 // pred_check_branch
      %21 = sbr.rel (0) target = $region17
    $region16: #{simclr_stage2_forward.1} parent=1 // pred_region
      _
    $region17: #{simclr_stage2_forward.1} parent=1 // pred_fallthru
      _
    // Predicated region
    $region18: #{simclr_stage2_forward.1} parent=1 // pred_check
      _
    $region19: #{simclr_stage2_forward.1} parent=1 // pred_check_branch
      %23 = sbr.rel (0) target = $region21
    $region20: #{simclr_stage2_forward.1} parent=1 // pred_region
      _
    $region21: #{simclr_stage2_forward.1} parent=1 // pred_fallthru
      _
    // Predicated region
    $region22: #{simclr_stage2_forward.1} parent=1 // pred_check
      _
    $region23: #{simclr_stage2_forward.1} parent=1 // pred_check_branch
      %25 = sbr.rel (0) target = $region25
    $region24: #{simclr_stage2_forward.1} parent=1 // pred_region
      _
    $region25: #{simclr_stage2_forward.1} parent=1 // pred_fallthru
      _
    // Predicated region
    $region26: #{simclr_stage2_forward.1} parent=1 // pred_check
      _
    $region27: #{simclr_stage2_forward.1} parent=1 // pred_check_branch
      %27 = sbr.rel (0) target = $region29
    $region28: #{simclr_stage2_forward.1} parent=1 // pred_region
      _
    $region29: #{simclr_stage2_forward.1} parent=1 // pred_fallthru
      _
    %v29 = vld [vmem:[%s0] sm:$0xf]
    %v30 = vld [vmem:[%s2] sm:$0xf]
    %v31 = vld [vmem:[%s2 + $0x4] sm:$0xf]
    %v32 = vld [vmem:[%s1] sm:$0xf]
    %v33 = vld [vmem:[%s3] sm:$0xf]
    %v34 = vld [vmem:[%s3 + $0x4] sm:$0xf]
    %v37 = vunpack.c.l.b16 %v33
    %v38 = vunpack.c.l.b16 %v34
    %v39 = vpack.c.b16 %v38, %v37
    %vm41 = vcmask 130048
    %v43 = vsel %vm41, %v32, 0
    %45 = vmatpush.bf16.msra.mxu0 0
    %46 = vmatpush.bf16.msra.mxu0 0
    %47 = vmatpush.bf16.msra.mxu0 0
    %48 = vmatpush.bf16.msra.mxu0 0
    %49 = vmatpush.bf16.msra.mxu0 0
    %50 = vmatpush.bf16.msra.mxu0 0
    %51 = vmatpush.bf16.msra.mxu0 0
    %52 = vmatpush.bf16.msra.mxu0 %v39
    %53 = vmatmul.bf16.gmra.mxu0 %v43
    %v54 = vpop.f32.mrf.mxu0
    %v55 = vadd.f32 0.0, %v54
    %v56 = vpop.f32.mrf.mxu0
    %57 = vdwg.mxu0
    %v60 = vunpack.c.l.b16 %v30
    %v61 = vunpack.c.l.b16 %v31
    %v62 = vpack.c.b16 %v61, %v60
    %v65 = vsel %vm41, %v29, 0
    %67 = vmatpush.bf16.msra.mxu0 0
    %68 = vmatpush.bf16.msra.mxu0 0
    %69 = vmatpush.bf16.msra.mxu0 0
    %70 = vmatpush.bf16.msra.mxu0 0
    %71 = vmatpush.bf16.msra.mxu0 0
    %72 = vmatpush.bf16.msra.mxu0 0
    %73 = vmatpush.bf16.msra.mxu0 0
    %74 = vmatpush.bf16.msra.mxu0 %v62
    %75 = vmatmul.bf16.gmra.mxu0 %v65
    %v76 = vpop.f32.mrf.mxu0
    %v77 = vadd.f32 %v55, %v76
    %v78 = vpop.f32.mrf.mxu0
    %79 = vdwg.mxu0
    %v80 = vld [vmem:[%s4] sm:$0x1]
    %v82 = vperm.slane %v80, 0
    %v84 = vadd.f32 %v77, %v82
    %v85 = vmax.f32 %v84, 0.0
    %v86 = vld [vmem:[%s5] sm:$0x1]
    %v88 = vperm.slane %v86, 0
    %v90 = vmul.f32 %v85, %v88
    %vm91 = vcmask 261120
    %v92 = vsel %vm91, %v90, 0.0
    %93 = vadd.xlane.f32.xlu0 %v92
    %v94 = vpop.xlane.xlu0 %93
    %s95 = sld [smem:[#allocation2]]
    %v96 = vstv %s95
    %v97 = vadd.f32 %v94, %v96
    %v98 = vxor.u32 %v97, 2147483648
    %v99 = vmul.f32 %v98, 1.442695
    %v100 = vpow.pop %v99
    %v101 = vadd.f32 %v100, 1.0
    %v102 = vrcp.pop %v101
    %v103 = vmul.f32 %v101, %v102
    %v104 = vsub.f32 1.0, %v103
    %v105 = vmul.f32 %v102, %v104
    %v106 = vadd.f32 %v102, %v105
    %vm107 = vweird.f32 %v101
    %vm108 = vweird.f32 %v102
    %vm109 = vmor %vm107, %vm108
    %v110 = vsel %vm109, %v102, %v106
    %v111 = vand.u32 2147483647, %v101
    %vm112 = vcmp.eq.f32.partialorder %v111, 8.507059e+37
    %v113 = vand.u32 %v101, 2147483648
    %v114 = vor.u32 1.1754944e-38, %v113
    %v115 = vsel %vm112, %v114, %v110
    %v116 = vmul.f32 1.0, %v115
    %v118 = vlaneseq
    %v119 = vand.u32 %v118, 127
    %v120 = vperm.slane %v116, %v119
    %vm122 = vcmask 57344
    %123 = vst.msk [vmem:[#allocation3] sm:$0x1] %vm122, %v120
    // Predicated region
    $region30: #{simclr_stage2_forward.1} parent=1 // pred_check
      _
    $region31: #{simclr_stage2_forward.1} parent=1 // pred_check_branch
      %125 = sbr.rel (0) target = $region33
    $region32: #{simclr_stage2_forward.1} parent=1 // pred_region
      %127 = vsyncadd [#allocation4], 0
      %s129 = sshll.u32 [#allocation3], 4
      %s130 = int_to_ptr.vmem [resolvable:$true] %s129
      %s131 = sshll.u32 %s7, 4
      %s132 = int_to_ptr.hbm [resolvable:$true] %s131
      %134 = dma.vmem_to_hbm [thread:$0]  %s130, 16, %s132, [#allocation4]
    $region33: #{simclr_stage2_forward.1} parent=1 // pred_fallthru
      _
    // Predicated region
    $region34: #{simclr_stage2_forward.1} parent=1 // pred_check
      _
    $region35: #{simclr_stage2_forward.1} parent=1 // pred_check_branch
      %136 = sbr.rel (0) target = $region37
    $region36: #{simclr_stage2_forward.1} parent=1 // pred_region
      %138 = dma.done [#allocation4], 16
    $region37: #{simclr_stage2_forward.1} parent=1 // pred_fallthru
      _
    %139 = vsyncpa [#allocation4], 1

</llo_original>
